<compile_context>
chip_gen: v6e
topology: v6e:2x2x1
jax: 0.10.0
libtpu: 0.0.40
codegen_flags: <defaults>
</compile_context>

<pallas_src>
import jax
import jax.numpy as jnp
from jax.experimental import pallas as pl
from jax.experimental.pallas import tpu as pltpu


def _silu_f32(x):
    # exact silu in f32: x * sigmoid(x)
    return x * (1.0 / (1.0 + jnp.exp(-x)))


def mlp_kernel(x_ref, wg_ref, bg_ref, wu_ref, bu_ref, w2_ref, b2_ref,
               o_ref, acc_ref):
    i = pl.program_id(1)

    @pl.when(i == 0)
    def _():
        acc_ref[...] = jnp.zeros_like(acc_ref)

    x = x_ref[...]
    # gate / up projections for this ffn slab (MXU, f32 accumulate)
    g = jnp.dot(x, wg_ref[...], preferred_element_type=jnp.float32)
    g = g + bg_ref[...].astype(jnp.float32)
    u = jnp.dot(x, wu_ref[...], preferred_element_type=jnp.float32)
    u = u + bu_ref[...].astype(jnp.float32)
    # swiglu
    h = _silu_f32(g) * u
    # partial second matmul accumulated across the I (ffn) grid axis
    acc_ref[...] += jnp.dot(h.astype(w2_ref.dtype), w2_ref[...],
                            preferred_element_type=jnp.float32)

    @pl.when(i == pl.num_programs(1) - 1)
    def _():
        o_ref[...] = (acc_ref[...] +
                      b2_ref[...].astype(jnp.float32)).astype(o_ref.dtype)


def mixchatglm_mlp(x, w1, b1, w2, b2, *, tm=256, ti=1024):
    """x: (B, S, H); w1: (H, 2I); b1: (2I,); w2: (I, H); b2: (H,)."""
    B, S, H = x.shape
    two_i = w1.shape[1]
    I = two_i // 2
    M = B * S

    tm = min(tm, M)
    ti = min(ti, I)
    assert M % tm == 0 and I % ti == 0, "tile sizes must divide M and ffn dim"

    x2 = x.reshape(M, H)
    # split combined h->4h projection into gate / up halves (chunk(…, 2, -1))
    wg, wu = w1[:, :I], w1[:, I:]
    bg = b1[:I].reshape(1, I)
    bu = b1[I:].reshape(1, I)
    b2r = b2.reshape(1, H)

    bytes_el = x.dtype.itemsize
    cost = pl.CostEstimate(
        flops=6 * M * H * I,                 # 2*M*H*2I (gate+up) + 2*M*I*H
        transcendentals=M * I,               # exp in sigmoid
        bytes_accessed=(x2.size + w1.size + b1.size + w2.size + b2.size
                        + M * H) * bytes_el,
    )

    out = pl.pallas_call(
        mlp_kernel,
        out_shape=jax.ShapeDtypeStruct((M, H), x.dtype),
        grid_spec=pltpu.PrefetchScalarGridSpec(
            num_scalar_prefetch=0,
            grid=(M // tm, I // ti),
            in_specs=[
                pl.BlockSpec((tm, H), lambda m, i: (m, 0)),   # x tile
                pl.BlockSpec((H, ti), lambda m, i: (0, i)),   # W_gate slab
                pl.BlockSpec((1, ti), lambda m, i: (0, i)),   # b_gate slab
                pl.BlockSpec((H, ti), lambda m, i: (0, i)),   # W_up slab
                pl.BlockSpec((1, ti), lambda m, i: (0, i)),   # b_up slab
                pl.BlockSpec((ti, H), lambda m, i: (i, 0)),   # W2 slab
                pl.BlockSpec((1, H), lambda m, i: (0, 0)),    # b2
            ],
            out_specs=pl.BlockSpec((tm, H), lambda m, i: (m, 0)),
            scratch_shapes=[pltpu.VMEM((tm, H), jnp.float32)],
        ),
        compiler_params=pltpu.CompilerParams(
            dimension_semantics=("parallel", "arbitrary"),
            vmem_limit_bytes=48 << 20,
        ),
        cost_estimate=cost,
    )(x2, wg, bg, wu, bu, w2, b2r)

    return out.reshape(B, S, H)


def _reference(x, w1, b1, w2, b2):
    xf = x.astype(jnp.float32)
    h = jnp.dot(xf, w1.astype(jnp.float32)) + b1.astype(jnp.float32)
    g, u = jnp.split(h, 2, axis=-1)
    h = _silu_f32(g) * u
    y = jnp.dot(h, w2.astype(jnp.float32)) + b2.astype(jnp.float32)
    return y.astype(x.dtype)


if __name__ == "__main__":
    # Small ChatGLM-like shapes: batch=2, seq=8, hidden=32, ffn=256 (so 2*ffn=512)
    B, S, H = 2, 8, 32
    I = 256

    key = jax.random.PRNGKey(0)
    k1, k2, k3, k4, k5 = jax.random.split(key, 5)

    x = jax.random.normal(k1, (B, S, H), dtype=jnp.float32)
    # dense_h_to_4h: Linear(H -> 2I); stored transposed as (H, 2I) so kernel does x @ W
    w1 = jax.random.normal(k2, (H, 2 * I), dtype=jnp.float32) * 0.02
    b1 = jax.random.normal(k3, (2 * I,), dtype=jnp.float32) * 0.02
    # dense_4h_to_h: Linear(I -> H); stored transposed as (I, H)
    w2 = jax.random.normal(k4, (I, H), dtype=jnp.float32) * 0.02
    b2 = jax.random.normal(k5, (H,), dtype=jnp.float32) * 0.02

    # exercise the 2-D tiled grid even at toy shapes
    y = mixchatglm_mlp(x, w1, b1, w2, b2, tm=8, ti=128)
    jax.block_until_ready(y)

    y_ref = _reference(x, w1, b1, w2, b2)
    assert y.shape == (B, S, H)
    assert jnp.allclose(y, y_ref, atol=1e-4, rtol=1e-4), "mismatch vs reference"

    print("KERNEL_OK")
</pallas_src>

<mosaic_0001>
module attributes {stable_mosaic.version = 11 : i64} {
  func.func @mlp_kernel(%arg0: i32, %arg1: i32, %arg2: memref<8x32xf32, #tpu.memory_space<vmem>>, %arg3: memref<32x128xf32, #tpu.memory_space<vmem>>, %arg4: memref<1x128xf32, #tpu.memory_space<vmem>>, %arg5: memref<32x128xf32, #tpu.memory_space<vmem>>, %arg6: memref<1x128xf32, #tpu.memory_space<vmem>>, %arg7: memref<128x32xf32, #tpu.memory_space<vmem>>, %arg8: memref<1x32xf32, #tpu.memory_space<vmem>>, %arg9: memref<8x32xf32, #tpu.memory_space<vmem>>, %arg10: memref<8x32xf32, #tpu.memory_space<vmem>>) attributes {dimension_semantics = [#tpu.dimension_semantics<parallel>, #tpu.dimension_semantics<arbitrary>], iteration_bounds = array<i64: 2, 2>, scalar_prefetch = 0 : i64, scratch_operands = 1 : i64, tpu.core_type = #tpu.core_type<tc>, window_params = [{transform_indices = @transform_0, window_bounds = array<i64: 8, 32>}, {transform_indices = @transform_1, window_bounds = array<i64: 32, 128>}, {transform_indices = @transform_2, window_bounds = array<i64: 1, 128>}, {transform_indices = @transform_3, window_bounds = array<i64: 32, 128>}, {transform_indices = @transform_4, window_bounds = array<i64: 1, 128>}, {transform_indices = @transform_5, window_bounds = array<i64: 128, 32>}, {pipeline_mode = #tpu.pipeline_mode<synchronous>, transform_indices = @transform_6, window_bounds = array<i64: 1, 32>}, {transform_indices = @transform_7, window_bounds = array<i64: 8, 32>}]} {
    %c0_i32 = arith.constant 0 : i32
    %0 = arith.cmpi eq, %arg1, %c0_i32 : i32
    %1 = arith.extui %0 : i1 to i32
    %c0_i32_0 = arith.constant 0 : i32
    %2 = arith.cmpi ne, %1, %c0_i32_0 : i32
    scf.if %2 {
      %cst_22 = arith.constant 0.000000e+00 : f32
      %31 = vector.broadcast %cst_22 : f32 to vector<8x32xf32>
      %c0_23 = arith.constant 0 : index
      %c0_24 = arith.constant 0 : index
      %32 = vector.load %arg10[%c0_23, %c0_24] : memref<8x32xf32, #tpu.memory_space<vmem>>, vector<8x32xf32>
      tpu.vector_store %arg10[%c0_23, %c0_24], %31 {strides = array<i32>} : memref<8x32xf32, #tpu.memory_space<vmem>>, vector<8x32xf32>,
    } else {
    }
    %c0 = arith.constant 0 : index
    %c0_1 = arith.constant 0 : index
    %3 = vector.load %arg2[%c0, %c0_1] : memref<8x32xf32, #tpu.memory_space<vmem>>, vector<8x32xf32>
    %c0_2 = arith.constant 0 : index
    %c0_3 = arith.constant 0 : index
    %4 = vector.load %arg3[%c0_2, %c0_3] : memref<32x128xf32, #tpu.memory_space<vmem>>, vector<32x128xf32>
    %cst = arith.constant dense<0.000000e+00> : vector<8x128xf32>
    %5 = tpu.matmul %3, %4, %cst {dimension_numbers = #tpu.dot_dimension_numbers<[1], [0], [0], [1], [0, 0, 1, 1], [], []>} : vector<8x32xf32>, vector<32x128xf32>, vector<8x128xf32> -> vector<8x128xf32>
    %c0_4 = arith.constant 0 : index
    %c0_5 = arith.constant 0 : index
    %6 = vector.load %arg4[%c0_4, %c0_5] : memref<1x128xf32, #tpu.memory_space<vmem>>, vector<1x128xf32>
    %7 = vector.broadcast %6 : vector<1x128xf32> to vector<8x128xf32>
    %8 = arith.addf %5, %7 : vector<8x128xf32>
    %c0_6 = arith.constant 0 : index
    %c0_7 = arith.constant 0 : index
    %9 = vector.load %arg5[%c0_6, %c0_7] : memref<32x128xf32, #tpu.memory_space<vmem>>, vector<32x128xf32>
    %cst_8 = arith.constant dense<0.000000e+00> : vector<8x128xf32>
    %10 = tpu.matmul %3, %9, %cst_8 {dimension_numbers = #tpu.dot_dimension_numbers<[1], [0], [0], [1], [0, 0, 1, 1], [], []>} : vector<8x32xf32>, vector<32x128xf32>, vector<8x128xf32> -> vector<8x128xf32>
    %c0_9 = arith.constant 0 : index
    %c0_10 = arith.constant 0 : index
    %11 = vector.load %arg6[%c0_9, %c0_10] : memref<1x128xf32, #tpu.memory_space<vmem>>, vector<1x128xf32>
    %12 = vector.broadcast %11 : vector<1x128xf32> to vector<8x128xf32>
    %13 = arith.addf %10, %12 : vector<8x128xf32>
    %cst_11 = arith.constant 0.000000e+00 : f32
    %14 = vector.broadcast %cst_11 : f32 to vector<8x128xf32>
    %15 = arith.subf %14, %8 : vector<8x128xf32>
    %16 = math.exp %15 : vector<8x128xf32>
    %cst_12 = arith.constant 1.000000e+00 : f32
    %17 = vector.broadcast %cst_12 : f32 to vector<8x128xf32>
    %18 = arith.addf %17, %16 : vector<8x128xf32>
    %cst_13 = arith.constant 1.000000e+00 : f32
    %19 = vector.broadcast %cst_13 : f32 to vector<8x128xf32>
    %20 = arith.divf %19, %18 : vector<8x128xf32>
    %21 = arith.mulf %8, %20 : vector<8x128xf32>
    %22 = arith.mulf %21, %13 : vector<8x128xf32>
    %c0_14 = arith.constant 0 : index
    %c0_15 = arith.constant 0 : index
    %23 = vector.load %arg10[%c0_14, %c0_15] : memref<8x32xf32, #tpu.memory_space<vmem>>, vector<8x32xf32>
    %c0_16 = arith.constant 0 : index
    %c0_17 = arith.constant 0 : index
    %24 = vector.load %arg7[%c0_16, %c0_17] : memref<128x32xf32, #tpu.memory_space<vmem>>, vector<128x32xf32>
    %cst_18 = arith.constant dense<0.000000e+00> : vector<8x32xf32>
    %25 = tpu.matmul %22, %24, %cst_18 {dimension_numbers = #tpu.dot_dimension_numbers<[1], [0], [0], [1], [0, 0, 1, 1], [], []>} : vector<8x128xf32>, vector<128x32xf32>, vector<8x32xf32> -> vector<8x32xf32>
    %26 = arith.addf %23, %25 : vector<8x32xf32>
    %c0_19 = arith.constant 0 : index
    %c0_20 = arith.constant 0 : index
    %27 = vector.load %arg10[%c0_19, %c0_20] : memref<8x32xf32, #tpu.memory_space<vmem>>, vector<8x32xf32>
    tpu.vector_store %arg10[%c0_19, %c0_20], %26 {strides = array<i32>} : memref<8x32xf32, #tpu.memory_space<vmem>>, vector<8x32xf32>,
    %c1_i32 = arith.constant 1 : i32
    %28 = arith.cmpi eq, %arg1, %c1_i32 : i32
    %29 = arith.extui %28 : i1 to i32
    %c0_i32_21 = arith.constant 0 : i32
    %30 = arith.cmpi ne, %29, %c0_i32_21 : i32
    scf.if %30 {
      %c0_22 = arith.constant 0 : index
      %c0_23 = arith.constant 0 : index
      %31 = vector.load %arg10[%c0_22, %c0_23] : memref<8x32xf32, #tpu.memory_space<vmem>>, vector<8x32xf32>
      %c0_24 = arith.constant 0 : index
      %c0_25 = arith.constant 0 : index
      %32 = vector.load %arg8[%c0_24, %c0_25] : memref<1x32xf32, #tpu.memory_space<vmem>>, vector<1x32xf32>
      %33 = vector.broadcast %32 : vector<1x32xf32> to vector<8x32xf32>
      %34 = arith.addf %31, %33 : vector<8x32xf32>
      %c0_26 = arith.constant 0 : index
      %c0_27 = arith.constant 0 : index
      %35 = vector.load %arg9[%c0_26, %c0_27] : memref<8x32xf32, #tpu.memory_space<vmem>>, vector<8x32xf32>
      tpu.vector_store %arg9[%c0_26, %c0_27], %34 {strides = array<i32>} : memref<8x32xf32, #tpu.memory_space<vmem>>, vector<8x32xf32>,
    } else {
    }
    return
  }
  func.func @transform_0(%arg0: i32, %arg1: i32) -> (i32, i32) {
    %c0_i32 = arith.constant 0 : i32
    %c0_i32_0 = arith.constant 0 : i32
    return %arg0, %c0_i32 : i32, i32
  }
  func.func @transform_1(%arg0: i32, %arg1: i32) -> (i32, i32) {
    %c0_i32 = arith.constant 0 : i32
    %c0_i32_0 = arith.constant 0 : i32
    return %c0_i32, %arg1 : i32, i32
  }
  func.func @transform_2(%arg0: i32, %arg1: i32) -> (i32, i32) {
    %c0_i32 = arith.constant 0 : i32
    %c0_i32_0 = arith.constant 0 : i32
    return %c0_i32, %arg1 : i32, i32
  }
  func.func @transform_3(%arg0: i32, %arg1: i32) -> (i32, i32) {
    %c0_i32 = arith.constant 0 : i32
    %c0_i32_0 = arith.constant 0 : i32
    return %c0_i32, %arg1 : i32, i32
  }
  func.func @transform_4(%arg0: i32, %arg1: i32) -> (i32, i32) {
    %c0_i32 = arith.constant 0 : i32
    %c0_i32_0 = arith.constant 0 : i32
    return %c0_i32, %arg1 : i32, i32
  }
  func.func @transform_5(%arg0: i32, %arg1: i32) -> (i32, i32) {
    %c0_i32 = arith.constant 0 : i32
    %c0_i32_0 = arith.constant 0 : i32
    return %arg1, %c0_i32 : i32, i32
  }
  func.func @transform_6(%arg0: i32, %arg1: i32) -> (i32, i32) {
    %c0_i32 = arith.constant 0 : i32
    %c0_i32_0 = arith.constant 0 : i32
    %c0_i32_1 = arith.constant 0 : i32
    return %c0_i32, %c0_i32_0 : i32, i32
  }
  func.func @transform_7(%arg0: i32, %arg1: i32) -> (i32, i32) {
    %c0_i32 = arith.constant 0 : i32
    %c0_i32_0 = arith.constant 0 : i32
    return %arg0, %c0_i32 : i32, i32
  }
}

</mosaic_0001>

<llo_original>
// kernel: tpu_custom_call.1
$region0: #{tpu_custom_call.1}
  #allocation0 [shape = 'u32[]', space=smem, size = 0x4, offset = 0x4, fixed_abs, tag = 'smem constant byte address 0x4 - core index']
  #allocation1 [shape = 'u32[144,128]{1,0:T(1,128)}', space=vmem, size = 0x12000, scoped, tag = 'internal scratch']
  #allocation2 [shape = 'f32[8,32]{1,0:T(8,128)}', space=vmem, size = 0x1000, scoped, tag = 'scratch operand']
  %s0 = inlined_call_operand.vmem [shape: f32[16,32], index: 0, kind: input, shape index: {}]
  %s1 = inlined_call_operand.vmem [shape: f32[32,256], index: 1, kind: input, shape index: {}]
  %s2 = inlined_call_operand.vmem [shape: f32[1,256], index: 2, kind: input, shape index: {}]
  %s3 = inlined_call_operand.vmem [shape: f32[32,256], index: 3, kind: input, shape index: {}]
  %s4 = inlined_call_operand.vmem [shape: f32[1,256], index: 4, kind: input, shape index: {}]
  %s5 = inlined_call_operand.vmem [shape: f32[256,32], index: 5, kind: input, shape index: {}]
  %s6 = inlined_call_operand.vmem [shape: f32[1,32], index: 6, kind: input, shape index: {}]
  %s7 = inlined_call_operand.hbm [shape: f32[16,32], index: 7, kind: output, shape index: {}]
  %s8 = sld [smem:[#allocation0]]
  $region145: #{tpu_custom_call.1} parent=0
    _
  %s10 = ssub.s32 1, %s8
  %s11 = scalar_select 0, %s10, %s8
  $region1: #{tpu_custom_call.1} parent=0
    #allocation3 [shape = 'u8[32768]{0}', space=vmem, size = 0x8000, scoped, tag = 'input window, operand 1']
    #allocation4 [shape = 'u8[32768]{0}', space=vmem, size = 0x8000, scoped, tag = 'input window, operand 3']
    #allocation5 [shape = 'u8[8192]{0}', space=vmem, size = 0x2000, scoped, tag = 'output window, operand 0']
    #allocation6 [shape = 's32[2]{0}', space=sflag, size = 0x8, scoped, tag = 'scoped memory for tpu_custom_call.1']
    %12 = vsyncpa [#allocation6], 0
    %s13 = scalar_lea.sflag [#allocation6], 1
    %14 = vsyncpa %s13, 0
    loop: start=0, step=1, limit=6
    $region2: #{tpu_custom_call.1} parent=1 // loop_pre_header
      _
    $region3: #{tpu_custom_call.1} parent=1 // loop_header
      %s16 = sphi 0, %s20
      %p17 = scmp.ge.s32.totalorder %s16, 6
      %s23 = sphi 0, %s35
      %s24 = sphi 0, %s31
      %s25 = sphi 0, %s23
      %s26 = sphi 0, %s24
      %s27 = sphi 0, %s25
      %s28 = sphi 0, %s26
      %s38 = sphi 0, %s40
      %s41 = sphi 0, %s38
      %s42 = sphi 0, %s41
      %s58 = sphi 0, %s42
      %s64 = sphi 0, %s66
      %s67 = sphi 0, %s64
      %s68 = sphi 0, %s67
      %s84 = sphi 0, %s68
      %s90 = sphi 0, %s92
      %s93 = sphi 0, %s90
      %s94 = sphi 0, %s93
      %s110 = sphi 0, %s94
      %s116 = sphi 0, %s118
      %s119 = sphi 0, %s116
      %s120 = sphi 0, %s119
      %s136 = sphi 0, %s120
      %s142 = sphi 0, %s144
      %s145 = sphi 0, %s142
      %s146 = sphi 0, %s145
      %s162 = sphi 0, %s146
      %s168 = sphi 0, %s170
      %s171 = sphi 0, %s168
      %s172 = sphi 0, %s171
      %s188 = sphi 0, %s172
      %s192 = sphi 0, %s192
      %s194 = sphi 0, %s192
      %s195 = sphi 0, %s194
      %s209 = sphi 0, %s195
      %s215 = sphi 0, %s217
      %s218 = sphi 0, %s215
      %s219 = sphi 0, %s218
      %s235 = sphi 0, %s219
    $region4: #{tpu_custom_call.1} parent=1 // loop_header_branch
      %19 = sbr.rel (%p17) target = $region8
    $region5: #{tpu_custom_call.1} parent=1 // loop_body
      %s21 = ssub.s32 %s16, 1
      %s22 = ssub.s32 %s16, 2
      %s29 = sadd.s32 1, %s24
      %p30 = scmp.ge.s32.totalorder %s29, 2
      %s31 = scalar_select %p30, 0, %s29
      %s32 = sadd.s32 1, %s23
      %s33 = scalar_select %p30, %s32, %s23
      %p34 = scmp.ge.s32.totalorder %s33, 2
      %s35 = scalar_select %p34, 0, %s33
      %s36 = ssub.s32 %s23, %s35
      %p37 = scmp.eq.s32.totalorder %s36, 0
      %s39 = sadd.s32 %s38, 1
      %s40 = scalar_select %p37, %s38, %s39
      %p43 = pneg %p37
      %p44 = scmp.eq.s32.totalorder %s16, 3
      %p45 = por %p43, %p44
      %p46 = scmp.ne.s32.totalorder %s38, %s41
      %p47 = scmp.eq.s32.totalorder %s16, 0
      %p48 = por %p46, %p47
      %p49 = scmp.ne.s32.totalorder %s38, %s41
      %p50 = scmp.eq.s32.totalorder %s21, 3
      %p51 = por %p49, %p50
      %p52 = scmp.ne.s32.totalorder %s41, %s42
      %p53 = scmp.eq.s32.totalorder %s21, 0
      %p54 = por %p52, %p53
      %p55 = scmp.ne.s32.totalorder %s41, %s42
      %p56 = scmp.eq.s32.totalorder %s22, 3
      %p57 = por %p55, %p56
      %p59 = scmp.ne.s32.totalorder %s42, %s58
      %p60 = scmp.eq.s32.totalorder %s22, 0
      %p61 = por %p59, %p60
      %s62 = ssub.s32 %s24, %s31
      %p63 = scmp.eq.s32.totalorder %s62, 0
      %s65 = sadd.s32 %s64, 1
      %s66 = scalar_select %p63, %s64, %s65
      %p69 = pneg %p63
      %p70 = scmp.eq.s32.totalorder %s16, 3
      %p71 = por %p69, %p70
      %p72 = scmp.ne.s32.totalorder %s64, %s67
      %p73 = scmp.eq.s32.totalorder %s16, 0
      %p74 = por %p72, %p73
      %p75 = scmp.ne.s32.totalorder %s64, %s67
      %p76 = scmp.eq.s32.totalorder %s21, 3
      %p77 = por %p75, %p76
      %p78 = scmp.ne.s32.totalorder %s67, %s68
      %p79 = scmp.eq.s32.totalorder %s21, 0
      %p80 = por %p78, %p79
      %p81 = scmp.ne.s32.totalorder %s67, %s68
      %p82 = scmp.eq.s32.totalorder %s22, 3
      %p83 = por %p81, %p82
      %p85 = scmp.ne.s32.totalorder %s68, %s84
      %p86 = scmp.eq.s32.totalorder %s22, 0
      %p87 = por %p85, %p86
      %s88 = ssub.s32 %s24, %s31
      %p89 = scmp.eq.s32.totalorder %s88, 0
      %s91 = sadd.s32 %s90, 1
      %s92 = scalar_select %p89, %s90, %s91
      %p95 = pneg %p89
      %p96 = scmp.eq.s32.totalorder %s16, 3
      %p97 = por %p95, %p96
      %p98 = scmp.ne.s32.totalorder %s90, %s93
      %p99 = scmp.eq.s32.totalorder %s16, 0
      %p100 = por %p98, %p99
      %p101 = scmp.ne.s32.totalorder %s90, %s93
      %p102 = scmp.eq.s32.totalorder %s21, 3
      %p103 = por %p101, %p102
      %p104 = scmp.ne.s32.totalorder %s93, %s94
      %p105 = scmp.eq.s32.totalorder %s21, 0
      %p106 = por %p104, %p105
      %p107 = scmp.ne.s32.totalorder %s93, %s94
      %p108 = scmp.eq.s32.totalorder %s22, 3
      %p109 = por %p107, %p108
      %p111 = scmp.ne.s32.totalorder %s94, %s110
      %p112 = scmp.eq.s32.totalorder %s22, 0
      %p113 = por %p111, %p112
      %s114 = ssub.s32 %s24, %s31
      %p115 = scmp.eq.s32.totalorder %s114, 0
      %s117 = sadd.s32 %s116, 1
      %s118 = scalar_select %p115, %s116, %s117
      %p121 = pneg %p115
      %p122 = scmp.eq.s32.totalorder %s16, 3
      %p123 = por %p121, %p122
      %p124 = scmp.ne.s32.totalorder %s116, %s119
      %p125 = scmp.eq.s32.totalorder %s16, 0
      %p126 = por %p124, %p125
      %p127 = scmp.ne.s32.totalorder %s116, %s119
      %p128 = scmp.eq.s32.totalorder %s21, 3
      %p129 = por %p127, %p128
      %p130 = scmp.ne.s32.totalorder %s119, %s120
      %p131 = scmp.eq.s32.totalorder %s21, 0
      %p132 = por %p130, %p131
      %p133 = scmp.ne.s32.totalorder %s119, %s120
      %p134 = scmp.eq.s32.totalorder %s22, 3
      %p135 = por %p133, %p134
      %p137 = scmp.ne.s32.totalorder %s120, %s136
      %p138 = scmp.eq.s32.totalorder %s22, 0
      %p139 = por %p137, %p138
      %s140 = ssub.s32 %s24, %s31
      %p141 = scmp.eq.s32.totalorder %s140, 0
      %s143 = sadd.s32 %s142, 1
      %s144 = scalar_select %p141, %s142, %s143
      %p147 = pneg %p141
      %p148 = scmp.eq.s32.totalorder %s16, 3
      %p149 = por %p147, %p148
      %p150 = scmp.ne.s32.totalorder %s142, %s145
      %p151 = scmp.eq.s32.totalorder %s16, 0
      %p152 = por %p150, %p151
      %p153 = scmp.ne.s32.totalorder %s142, %s145
      %p154 = scmp.eq.s32.totalorder %s21, 3
      %p155 = por %p153, %p154
      %p156 = scmp.ne.s32.totalorder %s145, %s146
      %p157 = scmp.eq.s32.totalorder %s21, 0
      %p158 = por %p156, %p157
      %p159 = scmp.ne.s32.totalorder %s145, %s146
      %p160 = scmp.eq.s32.totalorder %s22, 3
      %p161 = por %p159, %p160
      %p163 = scmp.ne.s32.totalorder %s146, %s162
      %p164 = scmp.eq.s32.totalorder %s22, 0
      %p165 = por %p163, %p164
      %s166 = ssub.s32 %s24, %s31
      %p167 = scmp.eq.s32.totalorder %s166, 0
      %s169 = sadd.s32 %s168, 1
      %s170 = scalar_select %p167, %s168, %s169
      %p173 = pneg %p167
      %p174 = scmp.eq.s32.totalorder %s16, 3
      %p175 = por %p173, %p174
      %p176 = scmp.ne.s32.totalorder %s168, %s171
      %p177 = scmp.eq.s32.totalorder %s16, 0
      %p178 = por %p176, %p177
      %p179 = scmp.ne.s32.totalorder %s168, %s171
      %p180 = scmp.eq.s32.totalorder %s21, 3
      %p181 = por %p179, %p180
      %p182 = scmp.ne.s32.totalorder %s171, %s172
      %p183 = scmp.eq.s32.totalorder %s21, 0
      %p184 = por %p182, %p183
      %p185 = scmp.ne.s32.totalorder %s171, %s172
      %p186 = scmp.eq.s32.totalorder %s22, 3
      %p187 = por %p185, %p186
      %p189 = scmp.ne.s32.totalorder %s172, %s188
      %p190 = scmp.eq.s32.totalorder %s22, 0
      %p191 = por %p189, %p190
      %s193 = sadd.s32 %s192, 1
      %p196 = scmp.eq.s32.totalorder %s16, 3
      %p197 = scmp.ne.s32.totalorder %s192, %s194
      %p198 = scmp.eq.s32.totalorder %s16, 0
      %p199 = por %p197, %p198
      %p200 = scmp.ne.s32.totalorder %s192, %s194
      %p201 = scmp.eq.s32.totalorder %s21, 3
      %p202 = por %p200, %p201
      %p203 = scmp.ne.s32.totalorder %s194, %s195
      %p204 = scmp.eq.s32.totalorder %s21, 0
      %p205 = por %p203, %p204
      %p206 = scmp.ne.s32.totalorder %s194, %s195
      %p207 = scmp.eq.s32.totalorder %s22, 3
      %p208 = por %p206, %p207
      %p210 = scmp.ne.s32.totalorder %s195, %s209
      %p211 = scmp.eq.s32.totalorder %s22, 0
      %p212 = por %p210, %p211
      %s213 = ssub.s32 %s23, %s35
      %p214 = scmp.eq.s32.totalorder %s213, 0
      %s216 = sadd.s32 %s215, 1
      %s217 = scalar_select %p214, %s215, %s216
      %p220 = pneg %p214
      %p221 = scmp.eq.s32.totalorder %s16, 3
      %p222 = por %p220, %p221
      %p223 = scmp.ne.s32.totalorder %s215, %s218
      %p224 = scmp.eq.s32.totalorder %s16, 0
      %p225 = por %p223, %p224
      %p226 = scmp.ne.s32.totalorder %s215, %s218
      %p227 = scmp.eq.s32.totalorder %s21, 3
      %p228 = por %p226, %p227
      %p229 = scmp.ne.s32.totalorder %s218, %s219
      %p230 = scmp.eq.s32.totalorder %s21, 0
      %p231 = por %p229, %p230
      %p232 = scmp.ne.s32.totalorder %s218, %s219
      %p233 = scmp.eq.s32.totalorder %s22, 3
      %p234 = por %p232, %p233
      %p236 = scmp.ne.s32.totalorder %s219, %s235
      %p237 = scmp.eq.s32.totalorder %s22, 0
      %p238 = por %p236, %p237
      %p239 = scmp.le.s32.totalorder 1, %s16
      %p240 = scmp.lt.s32.totalorder %s16, 5
      %p241 = pnand %p239, %p240
      %p242 = pneg %p241
      // Predicated region
      $region9: #{tpu_custom_call.1} parent=5 // pred_check
        _
      $region10: #{tpu_custom_call.1} parent=5 // pred_check_branch
        %244 = sbr.rel (%p241) target = $region12
      $region11: #{tpu_custom_call.1} parent=5 // pred_region
        %s245 = ssub.s32 %s16, 1
        // Predicated region
        $region13: #{tpu_custom_call.1} parent=11 // pred_check
          %p246 = pneg %p205
        $region14: #{tpu_custom_call.1} parent=11 // pred_check_branch
          %248 = sbr.rel (%p246) target = $region16
        $region15: #{tpu_custom_call.1} parent=11 // pred_region
          _
        $region16: #{tpu_custom_call.1} parent=11 // pred_fallthru
          _
      $region12: #{tpu_custom_call.1} parent=5 // pred_fallthru
        _
      %p249 = scmp.lt.s32.totalorder %s16, 4
      // Predicated region
      $region17: #{tpu_custom_call.1} parent=5 // pred_check
        %p250 = pneg %p249
      $region18: #{tpu_custom_call.1} parent=5 // pred_check_branch
        %252 = sbr.rel (%p250) target = $region20
      $region19: #{tpu_custom_call.1} parent=5 // pred_region
        // Predicated region
        $region21: #{tpu_custom_call.1} parent=19 // pred_check
          %p253 = pneg %p48
        $region22: #{tpu_custom_call.1} parent=19 // pred_check_branch
          %255 = sbr.rel (%p253) target = $region24
        $region23: #{tpu_custom_call.1} parent=19 // pred_region
          %p256 = scmp.lt.s32.totalorder %s23, 1
          %s257 = scalar_select %p256, %s23, 1
          %s258 = smul.addr %s257, 8
          %s259 = scalar_lea.vmem %s0, %s258
        $region24: #{tpu_custom_call.1} parent=19 // pred_fallthru
          _
        // Predicated region
        $region25: #{tpu_custom_call.1} parent=19 // pred_check
          %p260 = pneg %p74
        $region26: #{tpu_custom_call.1} parent=19 // pred_check_branch
          %262 = sbr.rel (%p260) target = $region28
        $region27: #{tpu_custom_call.1} parent=19 // pred_region
          %s263 = sand.u32 %s64, 1
          %s264 = sand.u32 %s64, 1
          %s265 = smul.addr %s264, 32
          %s266 = scalar_lea.vmem [#allocation3], %s265
          %s267 = smul.addr %s24, 8
          %s268 = scalar_lea.vmem %s1, %s267
          // Predicated region
          $region29: #{tpu_custom_call.1} parent=27 // pred_check
            _
          $region30: #{tpu_custom_call.1} parent=27 // pred_check_branch
            %270 = sbr.rel (0) target = $region32
          $region31: #{tpu_custom_call.1} parent=27 // pred_region
            // Predicated region
            $region33: #{tpu_custom_call.1} parent=31 // pred_check
              _
            $region34: #{tpu_custom_call.1} parent=31 // pred_check_branch
              %272 = sbr.rel (0) target = $region36
            $region35: #{tpu_custom_call.1} parent=31 // pred_region
              // Predicated region
              $region48: #{tpu_custom_call.1} parent=35 // pred_check
                _
              $region49: #{tpu_custom_call.1} parent=35 // pred_check_branch
                %294 = sbr.rel (0) target = $region51
              $region50: #{tpu_custom_call.1} parent=35 // pred_region
                loop: start=0, step=1, limit=1
                $region52: #{tpu_custom_call.1} parent=50 // loop_pre_header
                  _
                $region53: #{tpu_custom_call.1} parent=50 // loop_header
                  %s296 = sphi 0, %s300
                  %p297 = scmp.ge.s32.totalorder %s296, 1
                  %s301 = sphi %s268, %s268
                  %s302 = sphi %s266, %s266
                $region54: #{tpu_custom_call.1} parent=50 // loop_header_branch
                  %299 = sbr.rel (%p297) target = $region58
                $region55: #{tpu_custom_call.1} parent=50 // loop_body
                  %v303 = vld [vmem:[%s301] sm:$0xff]
                  %304 = vst [vmem:[%s302] sm:$0xff] %v303
                  %v305 = vld [vmem:[%s301 + $0x10] sm:$0xff]
                  %306 = vst [vmem:[%s302 + $0x8] sm:$0xff] %v305
                  %v307 = vld [vmem:[%s301 + $0x20] sm:$0xff]
                  %308 = vst [vmem:[%s302 + $0x10] sm:$0xff] %v307
                  %v309 = vld [vmem:[%s301 + $0x30] sm:$0xff]
                  %310 = vst [vmem:[%s302 + $0x18] sm:$0xff] %v309
                $region56: #{tpu_custom_call.1} parent=50 // loop_footer
                  %s300 = sadd.s32 1, %s296
                $region57: #{tpu_custom_call.1} parent=50 // loop_footer_branch
                  %295 = sbr.rel target = $region53
                $region58: #{tpu_custom_call.1} parent=50 // loop_exit
                  _
              $region51: #{tpu_custom_call.1} parent=35 // pred_fallthru
                _
              // Predicated region
              $region59: #{tpu_custom_call.1} parent=35 // pred_check
                _
              $region60: #{tpu_custom_call.1} parent=35 // pred_check_branch
                %312 = sbr.rel target = $region62
              $region61: #{tpu_custom_call.1} parent=35 // pred_region
                _
              $region62: #{tpu_custom_call.1} parent=35 // pred_fallthru
                _
            $region36: #{tpu_custom_call.1} parent=31 // pred_fallthru
              _
            // Predicated region
            $region37: #{tpu_custom_call.1} parent=31 // pred_check
              _
            $region38: #{tpu_custom_call.1} parent=31 // pred_check_branch
              %274 = sbr.rel target = $region40
            $region39: #{tpu_custom_call.1} parent=31 // pred_region
              %s276 = ssub.s32 256, 1
              loop: start=0, step=1, limit=1
              $region41: #{tpu_custom_call.1} parent=39 // loop_pre_header
                _
              $region42: #{tpu_custom_call.1} parent=39 // loop_header
                %s278 = sphi 0, %s282
                %p279 = scmp.ge.s32.totalorder %s278, 1
                %s283 = sphi %s268, %s268
                %s284 = sphi %s266, %s266
              $region43: #{tpu_custom_call.1} parent=39 // loop_header_branch
                %281 = sbr.rel (%p279) target = $region47
              $region44: #{tpu_custom_call.1} parent=39 // loop_body
                %v285 = vld [vmem:[%s283] sm:%s276]
                %286 = vst [vmem:[%s284] sm:%s276] %v285
                %v287 = vld [vmem:[%s283 + $0x10] sm:%s276]
                %288 = vst [vmem:[%s284 + $0x8] sm:%s276] %v287
                %v289 = vld [vmem:[%s283 + $0x20] sm:%s276]
                %290 = vst [vmem:[%s284 + $0x10] sm:%s276] %v289
                %v291 = vld [vmem:[%s283 + $0x30] sm:%s276]
                %292 = vst [vmem:[%s284 + $0x18] sm:%s276] %v291
              $region45: #{tpu_custom_call.1} parent=39 // loop_footer
                %s282 = sadd.s32 1, %s278
              $region46: #{tpu_custom_call.1} parent=39 // loop_footer_branch
                %277 = sbr.rel target = $region42
              $region47: #{tpu_custom_call.1} parent=39 // loop_exit
                _
            $region40: #{tpu_custom_call.1} parent=31 // pred_fallthru
              _
          $region32: #{tpu_custom_call.1} parent=27 // pred_fallthru
            _
          %313 = vnop
        $region28: #{tpu_custom_call.1} parent=19 // pred_fallthru
          _
        // Predicated region
        $region63: #{tpu_custom_call.1} parent=19 // pred_check
          %p314 = pneg %p100
        $region64: #{tpu_custom_call.1} parent=19 // pred_check_branch
          %316 = sbr.rel (%p314) target = $region66
        $region65: #{tpu_custom_call.1} parent=19 // pred_region
          %p317 = scmp.lt.s32.totalorder %s24, 1
          %s318 = scalar_select %p317, %s24, 1
          %s319 = scalar_lea.vmem %s2, %s318
        $region66: #{tpu_custom_call.1} parent=19 // pred_fallthru
          _
        // Predicated region
        $region67: #{tpu_custom_call.1} parent=19 // pred_check
          %p320 = pneg %p126
        $region68: #{tpu_custom_call.1} parent=19 // pred_check_branch
          %322 = sbr.rel (%p320) target = $region70
        $region69: #{tpu_custom_call.1} parent=19 // pred_region
          %s323 = sand.u32 %s116, 1
          %s324 = sand.u32 %s116, 1
          %s325 = smul.addr %s324, 32
          %s326 = scalar_lea.vmem [#allocation4], %s325
          %s327 = smul.addr %s24, 8
          %s328 = scalar_lea.vmem %s3, %s327
          // Predicated region
          $region71: #{tpu_custom_call.1} parent=69 // pred_check
            _
          $region72: #{tpu_custom_call.1} parent=69 // pred_check_branch
            %330 = sbr.rel (0) target = $region74
          $region73: #{tpu_custom_call.1} parent=69 // pred_region
            // Predicated region
            $region75: #{tpu_custom_call.1} parent=73 // pred_check
              _
            $region76: #{tpu_custom_call.1} parent=73 // pred_check_branch
              %332 = sbr.rel (0) target = $region78
            $region77: #{tpu_custom_call.1} parent=73 // pred_region
              // Predicated region
              $region90: #{tpu_custom_call.1} parent=77 // pred_check
                _
              $region91: #{tpu_custom_call.1} parent=77 // pred_check_branch
                %354 = sbr.rel (0) target = $region93
              $region92: #{tpu_custom_call.1} parent=77 // pred_region
                loop: start=0, step=1, limit=1
                $region94: #{tpu_custom_call.1} parent=92 // loop_pre_header
                  _
                $region95: #{tpu_custom_call.1} parent=92 // loop_header
                  %s356 = sphi 0, %s360
                  %p357 = scmp.ge.s32.totalorder %s356, 1
                  %s361 = sphi %s328, %s328
                  %s362 = sphi %s326, %s326
                $region96: #{tpu_custom_call.1} parent=92 // loop_header_branch
                  %359 = sbr.rel (%p357) target = $region100
                $region97: #{tpu_custom_call.1} parent=92 // loop_body
                  %v363 = vld [vmem:[%s361] sm:$0xff]
                  %364 = vst [vmem:[%s362] sm:$0xff] %v363
                  %v365 = vld [vmem:[%s361 + $0x10] sm:$0xff]
                  %366 = vst [vmem:[%s362 + $0x8] sm:$0xff] %v365
                  %v367 = vld [vmem:[%s361 + $0x20] sm:$0xff]
                  %368 = vst [vmem:[%s362 + $0x10] sm:$0xff] %v367
                  %v369 = vld [vmem:[%s361 + $0x30] sm:$0xff]
                  %370 = vst [vmem:[%s362 + $0x18] sm:$0xff] %v369
                $region98: #{tpu_custom_call.1} parent=92 // loop_footer
                  %s360 = sadd.s32 1, %s356
                $region99: #{tpu_custom_call.1} parent=92 // loop_footer_branch
                  %355 = sbr.rel target = $region95
                $region100: #{tpu_custom_call.1} parent=92 // loop_exit
                  _
              $region93: #{tpu_custom_call.1} parent=77 // pred_fallthru
                _
              // Predicated region
              $region101: #{tpu_custom_call.1} parent=77 // pred_check
                _
              $region102: #{tpu_custom_call.1} parent=77 // pred_check_branch
                %372 = sbr.rel target = $region104
              $region103: #{tpu_custom_call.1} parent=77 // pred_region
                _
              $region104: #{tpu_custom_call.1} parent=77 // pred_fallthru
                _
            $region78: #{tpu_custom_call.1} parent=73 // pred_fallthru
              _
            // Predicated region
            $region79: #{tpu_custom_call.1} parent=73 // pred_check
              _
            $region80: #{tpu_custom_call.1} parent=73 // pred_check_branch
              %334 = sbr.rel target = $region82
            $region81: #{tpu_custom_call.1} parent=73 // pred_region
              %s336 = ssub.s32 256, 1
              loop: start=0, step=1, limit=1
              $region83: #{tpu_custom_call.1} parent=81 // loop_pre_header
                _
              $region84: #{tpu_custom_call.1} parent=81 // loop_header
                %s338 = sphi 0, %s342
                %p339 = scmp.ge.s32.totalorder %s338, 1
                %s343 = sphi %s328, %s328
                %s344 = sphi %s326, %s326
              $region85: #{tpu_custom_call.1} parent=81 // loop_header_branch
                %341 = sbr.rel (%p339) target = $region89
              $region86: #{tpu_custom_call.1} parent=81 // loop_body
                %v345 = vld [vmem:[%s343] sm:%s336]
                %346 = vst [vmem:[%s344] sm:%s336] %v345
                %v347 = vld [vmem:[%s343 + $0x10] sm:%s336]
                %348 = vst [vmem:[%s344 + $0x8] sm:%s336] %v347
                %v349 = vld [vmem:[%s343 + $0x20] sm:%s336]
                %350 = vst [vmem:[%s344 + $0x10] sm:%s336] %v349
                %v351 = vld [vmem:[%s343 + $0x30] sm:%s336]
                %352 = vst [vmem:[%s344 + $0x18] sm:%s336] %v351
              $region87: #{tpu_custom_call.1} parent=81 // loop_footer
                %s342 = sadd.s32 1, %s338
              $region88: #{tpu_custom_call.1} parent=81 // loop_footer_branch
                %337 = sbr.rel target = $region84
              $region89: #{tpu_custom_call.1} parent=81 // loop_exit
                _
            $region82: #{tpu_custom_call.1} parent=73 // pred_fallthru
              _
          $region74: #{tpu_custom_call.1} parent=69 // pred_fallthru
            _
          %373 = vnop
        $region70: #{tpu_custom_call.1} parent=19 // pred_fallthru
          _
        // Predicated region
        $region105: #{tpu_custom_call.1} parent=19 // pred_check
          %p374 = pneg %p152
        $region106: #{tpu_custom_call.1} parent=19 // pred_check_branch
          %376 = sbr.rel (%p374) target = $region108
        $region107: #{tpu_custom_call.1} parent=19 // pred_region
          %p377 = scmp.lt.s32.totalorder %s24, 1
          %s378 = scalar_select %p377, %s24, 1
          %s379 = scalar_lea.vmem %s4, %s378
        $region108: #{tpu_custom_call.1} parent=19 // pred_fallthru
          _
        // Predicated region
        $region109: #{tpu_custom_call.1} parent=19 // pred_check
          %p380 = pneg %p178
        $region110: #{tpu_custom_call.1} parent=19 // pred_check_branch
          %382 = sbr.rel (%p380) target = $region112
        $region111: #{tpu_custom_call.1} parent=19 // pred_region
          %s383 = smul.u32 16, %s24
          %p384 = scmp.lt.s32.totalorder %s383, 31
          %s385 = scalar_select %p384, %s383, 31
          %s386 = smul.addr %s385, 8
          %s387 = scalar_lea.vmem %s5, %s386
          %s388 = smul.u32 16, %s24
        $region112: #{tpu_custom_call.1} parent=19 // pred_fallthru
          _
      $region20: #{tpu_custom_call.1} parent=5 // pred_fallthru
        _
      %p389 = scmp.le.s32.totalorder 1, %s16
      %p390 = scmp.lt.s32.totalorder %s16, 5
      %p391 = pnand %p389, %p390
      %p392 = pneg %p391
      // Predicated region
      $region113: #{tpu_custom_call.1} parent=5 // pred_check
        _
      $region114: #{tpu_custom_call.1} parent=5 // pred_check_branch
        %394 = sbr.rel (%p391) target = $region116
      $region115: #{tpu_custom_call.1} parent=5 // pred_region
        %s395 = ssub.s32 %s16, 1
        %s396 = sand.u32 %s67, 1
        %s397 = sand.u32 %s67, 1
        %s398 = smul.addr %s397, 32
        %s399 = scalar_lea.vmem [#allocation3], %s398
        // Predicated region
        $region117: #{tpu_custom_call.1} parent=115 // pred_check
          %p400 = pneg %p80
        $region118: #{tpu_custom_call.1} parent=115 // pred_check_branch
          %402 = sbr.rel (%p400) target = $region120
        $region119: #{tpu_custom_call.1} parent=115 // pred_region
          _
        $region120: #{tpu_custom_call.1} parent=115 // pred_fallthru
          _
        %s403 = sand.u32 %s119, 1
        %s404 = sand.u32 %s119, 1
        %s405 = smul.addr %s404, 32
        %s406 = scalar_lea.vmem [#allocation4], %s405
        // Predicated region
        $region121: #{tpu_custom_call.1} parent=115 // pred_check
          %p407 = pneg %p132
        $region122: #{tpu_custom_call.1} parent=115 // pred_check_branch
          %409 = sbr.rel (%p407) target = $region124
        $region123: #{tpu_custom_call.1} parent=115 // pred_region
          _
        $region124: #{tpu_custom_call.1} parent=115 // pred_fallthru
          _
        %p410 = scmp.lt.s32.totalorder %s25, 1
        %s411 = scalar_select %p410, %s25, 1
        %s412 = smul.addr %s411, 8
        %s413 = scalar_lea.vmem %s0, %s412
        %p414 = pneg %p54
        %p415 = pneg %p51
        %s416 = sand.u32 %s67, 1
        %s417 = sand.u32 %s67, 1
        %s418 = smul.addr %s417, 32
        %s419 = scalar_lea.vmem [#allocation3], %s418
        %p420 = pneg %p80
        %p421 = pneg %p77
        %p422 = scmp.lt.s32.totalorder %s26, 1
        %s423 = scalar_select %p422, %s26, 1
        %s424 = scalar_lea.vmem %s2, %s423
        %p425 = pneg %p106
        %p426 = pneg %p103
        %s427 = sand.u32 %s119, 1
        %s428 = sand.u32 %s119, 1
        %s429 = smul.addr %s428, 32
        %s430 = scalar_lea.vmem [#allocation4], %s429
        %p431 = pneg %p132
        %p432 = pneg %p129
        %p433 = scmp.lt.s32.totalorder %s26, 1
        %s434 = scalar_select %p433, %s26, 1
        %s435 = scalar_lea.vmem %s4, %s434
        %p436 = pneg %p158
        %p437 = pneg %p155
        %s438 = smul.u32 16, %s26
        %p439 = scmp.lt.s32.totalorder %s438, 31
        %s440 = scalar_select %p439, %s438, 31
        %s441 = smul.addr %s440, 8
        %s442 = scalar_lea.vmem %s5, %s441
        %p443 = pneg %p184
        %p444 = pneg %p181
        %p445 = pneg %p205
        %p446 = pneg %p202
        %p447 = pneg %p231
        %p448 = pneg %p228
        %s449 = sand.u32 %s218, 1
        %s450 = scalar_lea.sflag [#allocation6], %s449
        %s451 = sand.u32 %s218, 1
        %s452 = smul.addr %s451, 8
        %s453 = scalar_lea.vmem [#allocation5], %s452
        %p454 = scmp.lt.s32.totalorder %s25, 1
        %s455 = scalar_select %p454, %s25, 1
        %s456 = smul.addr %s455, 8
        %s457 = scalar_lea.vmem %s0, %s456
        %p458 = scmp.lt.s32.totalorder %s26, 1
        %s459 = scalar_select %p458, %s26, 1
        %s460 = scalar_lea.vmem %s2, %s459
        %p461 = scmp.lt.s32.totalorder %s26, 1
        %s462 = scalar_select %p461, %s26, 1
        %s463 = scalar_lea.vmem %s4, %s462
        %s464 = smul.u32 16, %s26
        %p465 = scmp.lt.s32.totalorder %s464, 31
        %s466 = scalar_select %p465, %s464, 31
        %s467 = smul.addr %s466, 8
        %s468 = scalar_lea.vmem %s5, %s467
        %s469 = smul.u32 16, %s26
        %p470 = scmp.eq.s32.totalorder %s26, 0
        // Predicated region
        $region125: #{tpu_custom_call.1} parent=115 // pred_check
          %p471 = pneg %p470
        $region126: #{tpu_custom_call.1} parent=115 // pred_check_branch
          %473 = sbr.rel (%p471) target = $region128
        $region127: #{tpu_custom_call.1} parent=115 // pred_region
          %vm474 = vcmask 261120
          %475 = vst.msk [vmem:[#allocation2] sm:$0xff] %vm474, 0.0
        $region128: #{tpu_custom_call.1} parent=115 // pred_fallthru
          _
        %v476 = vld [vmem:[%s457] sm:$0xff]
        %v477 = vld [vmem:[%s399] sm:$0xff]
        %v478 = vld [vmem:[%s399 + $0x8] sm:$0xff]
        %v479 = vld [vmem:[%s399 + $0x10] sm:$0xff]
        %v480 = vld [vmem:[%s399 + $0x18] sm:$0xff]
        %v481 = vld [vmem:[%s460] sm:$0x1]
        %v483 = vlaneseq
        %v484 = vshrl.u32 %v483, 7
        %v485 = vsub.s32 0, %v484
        %v486 = vrot.slane %v481, %v485
        %vm488 = vcmask 261120
        %v490 = vsel %vm488, %v476, 0
        %492 = vmatprep.subr.mxu0 0.0
        %493 = vmatpush1.msra.mxu0 0.0
        %494 = vmatprep.subr.mxu0 0.0
        %495 = vmatpush1.msra.mxu0 0.0
        %496 = vmatprep.subr.mxu0 0.0
        %497 = vmatpush1.msra.mxu0 0.0
        %498 = vmatprep.subr.mxu0 0.0
        %499 = vmatpush1.msra.mxu0 0.0
        %500 = vmatprep.subr.mxu0 0.0
        %501 = vmatpush1.msra.mxu0 0.0
        %502 = vmatprep.subr.mxu0 0.0
        %503 = vmatpush1.msra.mxu0 0.0
        %504 = vmatprep.subr.mxu0 0.0
        %505 = vmatpush1.msra.mxu0 0.0
        %506 = vmatprep.subr.mxu0 0.0
        %507 = vmatpush1.msra.mxu0 0.0
        %508 = vmatprep.subr.mxu0 0.0
        %509 = vmatpush1.msra.mxu0 0.0
        %510 = vmatprep.subr.mxu0 0.0
        %511 = vmatpush1.msra.mxu0 0.0
        %512 = vmatprep.subr.mxu0 0.0
        %513 = vmatpush1.msra.mxu0 0.0
        %514 = vmatprep.subr.mxu0 0.0
        %515 = vmatpush1.msra.mxu0 0.0
        %516 = vmatprep.subr.mxu0 0.0
        %517 = vmatpush1.msra.mxu0 %v480
        %518 = vmatprep.subr.mxu0 0.0
        %519 = vmatpush1.msra.mxu0 %v479
        %520 = vmatprep.subr.mxu0 0.0
        %521 = vmatpush1.msra.mxu0 %v478
        %522 = vmatprep.subr.mxu0 0.0
        %523 = vmatpush1.msra.mxu0 %v477
        %524 = vmatprep.subr.mxu0 0.0
        %525 = vmatpush2.msra.mxu0 0.0
        %526 = vmatprep.subr.mxu0 0.0
        %527 = vmatpush2.msra.mxu0 0.0
        %528 = vmatprep.subr.mxu0 0.0
        %529 = vmatpush2.msra.mxu0 0.0
        %530 = vmatprep.subr.mxu0 0.0
        %531 = vmatpush2.msra.mxu0 0.0
        %532 = vmatprep.subr.mxu0 0.0
        %533 = vmatpush2.msra.mxu0 0.0
        %534 = vmatprep.subr.mxu0 0.0
        %535 = vmatpush2.msra.mxu0 0.0
        %536 = vmatprep.subr.mxu0 0.0
        %537 = vmatpush2.msra.mxu0 0.0
        %538 = vmatprep.subr.mxu0 0.0
        %539 = vmatpush2.msra.mxu0 0.0
        %540 = vmatprep.subr.mxu0 0.0
        %541 = vmatpush2.msra.mxu0 0.0
        %542 = vmatprep.subr.mxu0 0.0
        %543 = vmatpush2.msra.mxu0 0.0
        %544 = vmatprep.subr.mxu0 0.0
        %545 = vmatpush2.msra.mxu0 0.0
        %546 = vmatprep.subr.mxu0 0.0
        %547 = vmatpush2.msra.mxu0 0.0
        %548 = vmatprep.subr.mxu0 0.0
        %549 = vmatpush2.msra.mxu0 0.0
        %550 = vmatprep.subr.mxu0 0.0
        %551 = vmatpush2.msra.mxu0 0.0
        %552 = vmatprep.subr.mxu0 0.0
        %553 = vmatpush2.msra.mxu0 0.0
        %554 = vmatprep.subr.mxu0 0.0
        %555 = vmatpush2.msra.mxu0 0.0
        %556 = vmatprep.mubr.f32.mxu0 0.0
        %557 = vmatmul.mubr.f32.gmra.mxu0 %v490
        %v558 = vpop.f32.mrf.mxu0
        %v559 = vadd.f32 %v486, %v558
        %v560 = vpop.f32.mrf.mxu0
        %561 = vdwg.mxu0
        %v562 = vld [vmem:[%s406] sm:$0xff]
        %v563 = vld [vmem:[%s406 + $0x8] sm:$0xff]
        %v564 = vld [vmem:[%s406 + $0x10] sm:$0xff]
        %v565 = vld [vmem:[%s406 + $0x18] sm:$0xff]
        %v566 = vld [vmem:[%s463] sm:$0x1]
        %v568 = vlaneseq
        %v569 = vshrl.u32 %v568, 7
        %v570 = vsub.s32 0, %v569
        %v571 = vrot.slane %v566, %v570
        %573 = vmatprep.subr.mxu0 0.0
        %574 = vmatpush1.msra.mxu0 0.0
        %575 = vmatprep.subr.mxu0 0.0
        %576 = vmatpush1.msra.mxu0 0.0
        %577 = vmatprep.subr.mxu0 0.0
        %578 = vmatpush1.msra.mxu0 0.0
        %579 = vmatprep.subr.mxu0 0.0
        %580 = vmatpush1.msra.mxu0 0.0
        %581 = vmatprep.subr.mxu0 0.0
        %582 = vmatpush1.msra.mxu0 0.0
        %583 = vmatprep.subr.mxu0 0.0
        %584 = vmatpush1.msra.mxu0 0.0
        %585 = vmatprep.subr.mxu0 0.0
        %586 = vmatpush1.msra.mxu0 0.0
        %587 = vmatprep.subr.mxu0 0.0
        %588 = vmatpush1.msra.mxu0 0.0
        %589 = vmatprep.subr.mxu0 0.0
        %590 = vmatpush1.msra.mxu0 0.0
        %591 = vmatprep.subr.mxu0 0.0
        %592 = vmatpush1.msra.mxu0 0.0
        %593 = vmatprep.subr.mxu0 0.0
        %594 = vmatpush1.msra.mxu0 0.0
        %595 = vmatprep.subr.mxu0 0.0
        %596 = vmatpush1.msra.mxu0 0.0
        %597 = vmatprep.subr.mxu0 0.0
        %598 = vmatpush1.msra.mxu0 %v565
        %599 = vmatprep.subr.mxu0 0.0
        %600 = vmatpush1.msra.mxu0 %v564
        %601 = vmatprep.subr.mxu0 0.0
        %602 = vmatpush1.msra.mxu0 %v563
        %603 = vmatprep.subr.mxu0 0.0
        %604 = vmatpush1.msra.mxu0 %v562
        %605 = vmatprep.subr.mxu0 0.0
        %606 = vmatpush2.msra.mxu0 0.0
        %607 = vmatprep.subr.mxu0 0.0
        %608 = vmatpush2.msra.mxu0 0.0
        %609 = vmatprep.subr.mxu0 0.0
        %610 = vmatpush2.msra.mxu0 0.0
        %611 = vmatprep.subr.mxu0 0.0
        %612 = vmatpush2.msra.mxu0 0.0
        %613 = vmatprep.subr.mxu0 0.0
        %614 = vmatpush2.msra.mxu0 0.0
        %615 = vmatprep.subr.mxu0 0.0
        %616 = vmatpush2.msra.mxu0 0.0
        %617 = vmatprep.subr.mxu0 0.0
        %618 = vmatpush2.msra.mxu0 0.0
        %619 = vmatprep.subr.mxu0 0.0
        %620 = vmatpush2.msra.mxu0 0.0
        %621 = vmatprep.subr.mxu0 0.0
        %622 = vmatpush2.msra.mxu0 0.0
        %623 = vmatprep.subr.mxu0 0.0
        %624 = vmatpush2.msra.mxu0 0.0
        %625 = vmatprep.subr.mxu0 0.0
        %626 = vmatpush2.msra.mxu0 0.0
        %627 = vmatprep.subr.mxu0 0.0
        %628 = vmatpush2.msra.mxu0 0.0
        %629 = vmatprep.subr.mxu0 0.0
        %630 = vmatpush2.msra.mxu0 0.0
        %631 = vmatprep.subr.mxu0 0.0
        %632 = vmatpush2.msra.mxu0 0.0
        %633 = vmatprep.subr.mxu0 0.0
        %634 = vmatpush2.msra.mxu0 0.0
        %635 = vmatprep.subr.mxu0 0.0
        %636 = vmatpush2.msra.mxu0 0.0
        %637 = vmatprep.mubr.f32.mxu0 0.0
        %638 = vmatmul.mubr.f32.gmra.mxu0 %v490
        %v639 = vpop.f32.mrf.mxu0
        %v640 = vadd.f32 %v571, %v639
        %v641 = vpop.f32.mrf.mxu0
        %642 = vdwg.mxu0
        %v643 = vsub.f32 0.0, %v559
        %v644 = vmul.f32 %v643, 1.442695
        %v645 = vpow.pop %v644
        %v646 = vadd.f32 %v645, 1.0
        %v647 = vrcp.pop %v646
        %v648 = vmul.f32 1.0, %v647
        %v649 = vmul.f32 %v559, %v648
        %v650 = vmul.f32 %v649, %v640
        %v651 = vld [vmem:[#allocation2] sm:$0xff]
        %v652 = vld [vmem:[%s468] sm:$0xff]
        %v653 = vld [vmem:[%s468 + $0x8] sm:$0xff]
        %v654 = vld [vmem:[%s468 + $0x10] sm:$0xff]
        %v655 = vld [vmem:[%s468 + $0x18] sm:$0xff]
        %v656 = vld [vmem:[%s468 + $0x20] sm:$0xff]
        %v657 = vld [vmem:[%s468 + $0x28] sm:$0xff]
        %v658 = vld [vmem:[%s468 + $0x30] sm:$0xff]
        %v659 = vld [vmem:[%s468 + $0x38] sm:$0xff]
        %v660 = vld [vmem:[%s468 + $0x40] sm:$0xff]
        %v661 = vld [vmem:[%s468 + $0x48] sm:$0xff]
        %v662 = vld [vmem:[%s468 + $0x50] sm:$0xff]
        %v663 = vld [vmem:[%s468 + $0x58] sm:$0xff]
        %v664 = vld [vmem:[%s468 + $0x60] sm:$0xff]
        %v665 = vld [vmem:[%s468 + $0x68] sm:$0xff]
        %v666 = vld [vmem:[%s468 + $0x70] sm:$0xff]
        %v667 = vld [vmem:[%s468 + $0x78] sm:$0xff]
        %668 = vmatprep.subr.mxu0 0.0
        %669 = vmatpush1.msra.mxu0 %v667
        %670 = vmatprep.subr.mxu0 0.0
        %671 = vmatpush1.msra.mxu0 %v666
        %672 = vmatprep.subr.mxu0 0.0
        %673 = vmatpush1.msra.mxu0 %v665
        %674 = vmatprep.subr.mxu0 0.0
        %675 = vmatpush1.msra.mxu0 %v664
        %676 = vmatprep.subr.mxu0 0.0
        %677 = vmatpush1.msra.mxu0 %v663
        %678 = vmatprep.subr.mxu0 0.0
        %679 = vmatpush1.msra.mxu0 %v662
        %680 = vmatprep.subr.mxu0 0.0
        %681 = vmatpush1.msra.mxu0 %v661
        %682 = vmatprep.subr.mxu0 0.0
        %683 = vmatpush1.msra.mxu0 %v660
        %684 = vmatprep.subr.mxu0 0.0
        %685 = vmatpush1.msra.mxu0 %v659
        %686 = vmatprep.subr.mxu0 0.0
        %687 = vmatpush1.msra.mxu0 %v658
        %688 = vmatprep.subr.mxu0 0.0
        %689 = vmatpush1.msra.mxu0 %v657
        %690 = vmatprep.subr.mxu0 0.0
        %691 = vmatpush1.msra.mxu0 %v656
        %692 = vmatprep.subr.mxu0 0.0
        %693 = vmatpush1.msra.mxu0 %v655
        %694 = vmatprep.subr.mxu0 0.0
        %695 = vmatpush1.msra.mxu0 %v654
        %696 = vmatprep.subr.mxu0 0.0
        %697 = vmatpush1.msra.mxu0 %v653
        %698 = vmatprep.subr.mxu0 0.0
        %699 = vmatpush1.msra.mxu0 %v652
        %700 = vmatprep.subr.mxu0 0.0
        %701 = vmatpush2.msra.mxu0 0.0
        %702 = vmatprep.subr.mxu0 0.0
        %703 = vmatpush2.msra.mxu0 0.0
        %704 = vmatprep.subr.mxu0 0.0
        %705 = vmatpush2.msra.mxu0 0.0
        %706 = vmatprep.subr.mxu0 0.0
        %707 = vmatpush2.msra.mxu0 0.0
        %708 = vmatprep.subr.mxu0 0.0
        %709 = vmatpush2.msra.mxu0 0.0
        %710 = vmatprep.subr.mxu0 0.0
        %711 = vmatpush2.msra.mxu0 0.0
        %712 = vmatprep.subr.mxu0 0.0
        %713 = vmatpush2.msra.mxu0 0.0
        %714 = vmatprep.subr.mxu0 0.0
        %715 = vmatpush2.msra.mxu0 0.0
        %716 = vmatprep.subr.mxu0 0.0
        %717 = vmatpush2.msra.mxu0 0.0
        %718 = vmatprep.subr.mxu0 0.0
        %719 = vmatpush2.msra.mxu0 0.0
        %720 = vmatprep.subr.mxu0 0.0
        %721 = vmatpush2.msra.mxu0 0.0
        %722 = vmatprep.subr.mxu0 0.0
        %723 = vmatpush2.msra.mxu0 0.0
        %724 = vmatprep.subr.mxu0 0.0
        %725 = vmatpush2.msra.mxu0 0.0
        %726 = vmatprep.subr.mxu0 0.0
        %727 = vmatpush2.msra.mxu0 0.0
        %728 = vmatprep.subr.mxu0 0.0
        %729 = vmatpush2.msra.mxu0 0.0
        %730 = vmatprep.subr.mxu0 0.0
        %731 = vmatpush2.msra.mxu0 0.0
        %732 = vmatprep.mubr.f32.mxu0 0.0
        %733 = vmatmul.mubr.f32.gmra.mxu0 %v650
        %v734 = vpop.f32.mrf.mxu0
        %v735 = vadd.f32 0.0, %v734
        %v736 = vpop.f32.mrf.mxu0
        %737 = vdwg.mxu0
        %v738 = vadd.f32 %v651, %v735
        %739 = vst.msk [vmem:[#allocation2] sm:$0xff] %vm488, %v738
        %p740 = scmp.eq.s32.totalorder %s26, 1
        // Predicated region
        $region129: #{tpu_custom_call.1} parent=115 // pred_check
          %p741 = pneg %p740
        $region130: #{tpu_custom_call.1} parent=115 // pred_check_branch
          %743 = sbr.rel (%p741) target = $region132
        $region131: #{tpu_custom_call.1} parent=115 // pred_region
          %v744 = vld [vmem:[#allocation2] sm:$0xff]
          %v745 = vld [vmem:[%s6] sm:$0x1]
          %v747 = vlaneseq
          %v748 = vshrl.u32 %v747, 7
          %v749 = vsub.s32 0, %v748
          %v750 = vrot.slane %v745, %v749
          %v752 = vadd.f32 %v744, %v750
          %753 = vst.msk [vmem:[%s453] sm:$0xff] %vm488, %v752
        $region132: #{tpu_custom_call.1} parent=115 // pred_fallthru
          _
        %s754 = sand.u32 %s218, 1
        %s755 = scalar_lea.sflag [#allocation6], %s754
        %s756 = sand.u32 %s218, 1
        %s757 = smul.addr %s756, 8
        %s758 = scalar_lea.vmem [#allocation5], %s757
        // Predicated region
        $region133: #{tpu_custom_call.1} parent=115 // pred_check
          %p759 = pneg %p228
        $region134: #{tpu_custom_call.1} parent=115 // pred_check_branch
          %761 = sbr.rel (%p759) target = $region136
        $region135: #{tpu_custom_call.1} parent=115 // pred_region
          %s763 = ssub.s32 128, 128
          %764 = vsyncadd %s755, %s763
          %s765 = smul.addr %s25, 128
          %s766 = scalar_lea.hbm %s7, %s765
          %s768 = sshll.u32 %s758, 4
          %s769 = int_to_ptr.vmem [resolvable:$true] %s768
          %771 = dma.vmem_to_hbm [thread:$0]  %s769, 128, %s766, %s755
        $region136: #{tpu_custom_call.1} parent=115 // pred_fallthru
          _
      $region116: #{tpu_custom_call.1} parent=5 // pred_fallthru
        _
      %p772 = scmp.le.s32.totalorder 2, %s16
      // Predicated region
      $region137: #{tpu_custom_call.1} parent=5 // pred_check
        %p773 = pneg %p772
      $region138: #{tpu_custom_call.1} parent=5 // pred_check_branch
        %775 = sbr.rel (%p773) target = $region140
      $region139: #{tpu_custom_call.1} parent=5 // pred_region
        %s776 = ssub.s32 %s16, 2
        // Predicated region
        $region141: #{tpu_custom_call.1} parent=139 // pred_check
          %p777 = pneg %p234
        $region142: #{tpu_custom_call.1} parent=139 // pred_check_branch
          %779 = sbr.rel (%p777) target = $region144
        $region143: #{tpu_custom_call.1} parent=139 // pred_region
          %s780 = sand.u32 %s219, 1
          %s781 = scalar_lea.sflag [#allocation6], %s780
          %s782 = sand.u32 %s219, 1
          %s783 = smul.addr %s782, 8
          %s784 = scalar_lea.vmem [#allocation5], %s783
          %785 = dma.done %s781, 128
        $region144: #{tpu_custom_call.1} parent=139 // pred_fallthru
          _
      $region140: #{tpu_custom_call.1} parent=5 // pred_fallthru
        _
    $region6: #{tpu_custom_call.1} parent=1 // loop_footer
      %s20 = sadd.s32 1, %s16
    $region7: #{tpu_custom_call.1} parent=1 // loop_footer_branch
      %15 = sbr.rel target = $region3
    $region8: #{tpu_custom_call.1} parent=1 // loop_exit
      _
    %786 = vsyncpa [#allocation6], 1
    %s787 = scalar_lea.sflag [#allocation6], 1
    %788 = vsyncpa %s787, 1

</llo_original>
